<compile_context>
chip_gen: v7x
topology: tpu7x:2x2x1
jax: 0.10.0
libtpu: 0.0.40
codegen_flags: <defaults>
</compile_context>

<pallas_src>
import functools
import math

import jax
import jax.numpy as jnp
from jax import lax
from jax.experimental import pallas as pl
from jax.experimental.pallas import tpu as pltpu


def _round_up(x, m):
    return ((x + m - 1) // m) * m


def _glove_fused_kernel(idx_ref, labels_ref,          # (TB, 2) i32, (TB, 1) f32 tiles
                        c_tab_ref, p_tab_ref,         # (V, DP) resident, bias folded in
                        out_ref,                      # (1, 1) loss
                        acc_w, acc_wa, acc_wa2, acc_b, acc_b2,   # (TB, 1) accumulators
                        *, d, log_x_max, alpha, n_valid):
    t = pl.program_id(0)
    tb = idx_ref.shape[0]
    v = c_tab_ref.shape[0]

    @pl.when(t == 0)
    def _():
        acc_w[...] = jnp.zeros_like(acc_w)
        acc_wa[...] = jnp.zeros_like(acc_wa)
        acc_wa2[...] = jnp.zeros_like(acc_wa2)
        acc_b[...] = jnp.zeros_like(acc_b)
        acc_b2[...] = jnp.zeros_like(acc_b2)

    # Validity mask for padded examples in the last tile.
    row = t * tb + lax.broadcasted_iota(jnp.int32, (tb, 1), 0)        # (TB, 1)
    valid = (row < n_valid).astype(jnp.float32)                        # (TB, 1)

    idx = idx_ref[...]                                                 # (TB, 2)
    c_idx = idx[:, 0:1]                                                # (TB, 1)
    p_idx = idx[:, 1:2]                                                # (TB, 1)
    lbl = labels_ref[...]                                              # (TB, 1)

    # One-hot row gather from the VMEM-resident tables (MXU matmul).  Bias
    # columns live at d (c_tab) and d+1 (p_tab); the opposite table is zero in
    # those columns so they never contaminate the dot product.
    # TODO(synk): hoist vocab_iota into a (TB, V) scratch initialized at t==0
    # if the bundle dump shows the VPU (not the MXU) is the binding unit.
    vocab_iota = lax.broadcasted_iota(jnp.int32, (tb, v), 1)           # (TB, V)
    onehot_c = (c_idx == vocab_iota).astype(jnp.float32)               # (TB, V)
    onehot_p = (p_idx == vocab_iota).astype(jnp.float32)               # (TB, V)
    # TODO(synk): on v5e, consider bf16 one-hots/tables (f32 accumulate) for
    # ~4x gather-matmul throughput if the loss tolerance allows.

    c_rows = jnp.dot(onehot_c, c_tab_ref[...],
                     preferred_element_type=jnp.float32)               # (TB, DP)
    p_rows = jnp.dot(onehot_p, p_tab_ref[...],
                     preferred_element_type=jnp.float32)               # (TB, DP)

    dot = jnp.sum(c_rows * p_rows, axis=1, keepdims=True)              # (TB, 1)
    cb = c_rows[:, d:d + 1]                                            # (TB, 1)
    pb = p_rows[:, d + 1:d + 2]                                        # (TB, 1)

    log_lbl = jnp.log(lbl)                                             # (TB, 1)
    # weight_j = min((l_j / x_max) ** alpha, 1) = min(exp(alpha*(log l - log x_max)), 1)
    w = jnp.minimum(jnp.exp(alpha * (log_lbl - log_x_max)), 1.0) * valid
    a = dot - log_lbl
    b = (cb + pb) * valid

    # Vector accumulators: elementwise only, no per-step reductions/stores.
    acc_w[...] += w
    acc_wa[...] += w * a
    acc_wa2[...] += w * a * a
    acc_b[...] += b
    acc_b2[...] += b * b

    @pl.when(t == pl.num_programs(0) - 1)
    def _():
        nf = jnp.float32(n_valid)
        s_w = jnp.sum(acc_w[...], keepdims=True)                       # (1, 1)
        s_wa = jnp.sum(acc_wa[...], keepdims=True)
        s_wa2 = jnp.sum(acc_wa2[...], keepdims=True)
        s_b = jnp.sum(acc_b[...], keepdims=True)
        s_b2 = jnp.sum(acc_b2[...], keepdims=True)
        total = nf * s_wa2 + 2.0 * s_wa * s_b + s_w * s_b2
        out_ref[...] = total / (nf * nf)


def glove_loss(params, c_idx, p_idx, labels, *, x_max, alpha, tile=512):
    c_embed, c_bias, p_embed, p_bias = params
    v, d = c_embed.shape
    n = int(c_idx.shape[0])

    # Example-tile size: multiple of 8 sublanes (ideally 128/256 for MXU shape),
    # capped at `tile` and at the (padded) problem size.
    tb = min(int(tile), _round_up(n, 8))
    tb = _round_up(tb, 8)
    n_pad = _round_up(n, tb)
    n_tiles = n_pad // tb
    pad = n_pad - n

    # One (N, 2) index array -> a single tiny DMA per step instead of two.
    idx = jnp.stack([c_idx.astype(jnp.int32), p_idx.astype(jnp.int32)], axis=1)
    idx = jnp.pad(idx, ((0, pad), (0, 0)))
    labels_p = jnp.pad(labels.astype(jnp.float32), (0, pad),
                       constant_values=1.0).reshape(n_pad, 1)

    # Fold biases into lane-padded copies of the embedding tables:
    #   c_tab[:, d]   = c_bias,   c_tab[:, d+1] = 0
    #   p_tab[:, d]   = 0,        p_tab[:, d+1] = p_bias
    dp = _round_up(d + 2, 128)
    c_tab = jnp.zeros((v, dp), jnp.float32)
    c_tab = c_tab.at[:, :d].set(c_embed.astype(jnp.float32))
    c_tab = c_tab.at[:, d].set(c_bias.astype(jnp.float32).reshape(v))
    p_tab = jnp.zeros((v, dp), jnp.float32)
    p_tab = p_tab.at[:, :d].set(p_embed.astype(jnp.float32))
    p_tab = p_tab.at[:, d + 1].set(p_bias.astype(jnp.float32).reshape(v))

    kernel = functools.partial(_glove_fused_kernel, d=d,
                               log_x_max=float(math.log(float(x_max))),
                               alpha=float(alpha), n_valid=n)

    # VMEM budget: single-buffered tables + double-buffered streaming tiles +
    # one-hot working set.  Default scoped limit (16/32 MiB) raised if needed.
    table_bytes = 2 * v * dp * 4                       # Buffered(1) resident tables
    stream_bytes = 2 * 2 * (tb * 2 * 4 + tb * 1 * 4)   # double-buffered idx/label tiles
    work_bytes = 4 * tb * v * 4 + 2 * tb * dp * 4      # one-hots, iota, gathered rows
    scratch_bytes = 5 * tb * 128 * 4                   # (TB,1) accums, lane-padded
    est = table_bytes + stream_bytes + work_bytes + scratch_bytes
    vmem_limit = int(min(max(2 * est, 32 << 20), 100 << 20))

    loss = pl.pallas_call(
        kernel,
        grid=(n_tiles,),
        in_specs=[
            pl.BlockSpec((tb, 2), lambda t: (t, 0)),               # stacked indices
            pl.BlockSpec((tb, 1), lambda t: (t, 0)),               # labels tile
            pl.BlockSpec((v, dp), lambda t: (0, 0),
                         pipeline_mode=pl.Buffered(1)),            # c table (resident)
            pl.BlockSpec((v, dp), lambda t: (0, 0),
                         pipeline_mode=pl.Buffered(1)),            # p table (resident)
        ],
        out_specs=pl.BlockSpec((1, 1), lambda t: (0, 0)),
        out_shape=jax.ShapeDtypeStruct((1, 1), jnp.float32),
        scratch_shapes=[pltpu.VMEM((tb, 1), jnp.float32)] * 5,
        compiler_params=pltpu.CompilerParams(
            dimension_semantics=("arbitrary",),
            vmem_limit_bytes=vmem_limit),
    )(idx, labels_p, c_tab, p_tab)
    return loss[0, 0]


def glove_loss_ref(params, c_idx, p_idx, labels, *, x_max, alpha):
    """Plain-JAX reference matching the (fixed) PyTorch forward."""
    c_embed, c_bias, p_embed, p_bias = params
    c = c_embed[c_idx]                     # (N, D)
    p = p_embed[p_idx]                     # (N, D)
    cb = c_bias[c_idx]                     # (N, 1)
    pb = p_bias[p_idx]                     # (N, 1)
    weight = jnp.minimum((labels / x_max) ** alpha, 1.0)        # (N,)
    pred = jnp.sum(c * p, axis=1) + cb + pb - jnp.log(labels)   # (N,)+(N,1)->(N,N)
    return jnp.mean(weight * pred ** 2)


if __name__ == "__main__":
    key = jax.random.PRNGKey(0)
    vocab_size, embedding_dim = 32, 32
    n = 20                       # not a multiple of the tile -> exercises padding
    x_max, alpha = 100.0, 0.75

    k1, k2, k3, k4, k5, k6, k7 = jax.random.split(key, 7)
    params = (
        jax.random.normal(k1, (vocab_size, embedding_dim), jnp.float32),  # c_embed
        jax.random.normal(k2, (vocab_size, 1), jnp.float32),              # c_bias
        jax.random.normal(k3, (vocab_size, embedding_dim), jnp.float32),  # p_embed
        jax.random.normal(k4, (vocab_size, 1), jnp.float32),              # p_bias
    )
    c_idx = jax.random.randint(k5, (n,), 0, vocab_size, dtype=jnp.int32)
    p_idx = jax.random.randint(k6, (n,), 0, vocab_size, dtype=jnp.int32)
    labels = jax.random.uniform(k7, (n,), jnp.float32, 1.0, 200.0)

    # tile=8 forces several grid steps (accumulation + padding paths covered).
    loss = glove_loss(params, c_idx, p_idx, labels,
                      x_max=x_max, alpha=alpha, tile=8)
    loss = jax.block_until_ready(loss)

    ref = glove_loss_ref(params, c_idx, p_idx, labels, x_max=x_max, alpha=alpha)
    assert jnp.allclose(loss, ref, rtol=1e-4, atol=1e-4), (loss, ref)
    print("KERNEL_OK")
</pallas_src>

<mosaic_0001>
module attributes {stable_mosaic.version = 11 : i64} {
  func.func @_glove_fused_kernel(%arg0: i32, %arg1: memref<8x2xi32, #tpu.memory_space<vmem>>, %arg2: memref<8x1xf32, #tpu.memory_space<vmem>>, %arg3: memref<32x128xf32, #tpu.memory_space<vmem>>, %arg4: memref<32x128xf32, #tpu.memory_space<vmem>>, %arg5: memref<1x1xf32, #tpu.memory_space<vmem>>, %arg6: memref<8x1xf32, #tpu.memory_space<vmem>>, %arg7: memref<8x1xf32, #tpu.memory_space<vmem>>, %arg8: memref<8x1xf32, #tpu.memory_space<vmem>>, %arg9: memref<8x1xf32, #tpu.memory_space<vmem>>, %arg10: memref<8x1xf32, #tpu.memory_space<vmem>>) attributes {dimension_semantics = [#tpu.dimension_semantics<arbitrary>], iteration_bounds = array<i64: 3>, scalar_prefetch = 0 : i64, scratch_operands = 5 : i64, tpu.core_type = #tpu.core_type<tc>, window_params = [{transform_indices = @transform_0, window_bounds = array<i64: 8, 2>}, {transform_indices = @transform_1, window_bounds = array<i64: 8, 1>}, {pipeline_mode = #tpu.pipeline_mode<synchronous>, transform_indices = @transform_2, window_bounds = array<i64: 32, 128>}, {pipeline_mode = #tpu.pipeline_mode<synchronous>, transform_indices = @transform_3, window_bounds = array<i64: 32, 128>}, {pipeline_mode = #tpu.pipeline_mode<synchronous>, transform_indices = @transform_4, window_bounds = array<i64: 1, 1>}]} {
    %c0_i32 = arith.constant 0 : i32
    %0 = arith.cmpi eq, %arg0, %c0_i32 : i32
    %1 = arith.extui %0 : i1 to i32
    %c0_i32_0 = arith.constant 0 : i32
    %2 = arith.cmpi ne, %1, %c0_i32_0 : i32
    scf.if %2 {
      %cst_34 = arith.constant 0.000000e+00 : f32
      %67 = vector.broadcast %cst_34 : f32 to vector<8x1xf32>
      %c0_35 = arith.constant 0 : index
      %c0_36 = arith.constant 0 : index
      %68 = vector.load %arg6[%c0_35, %c0_36] : memref<8x1xf32, #tpu.memory_space<vmem>>, vector<8x1xf32>
      tpu.vector_store %arg6[%c0_35, %c0_36], %67 {strides = array<i32>} : memref<8x1xf32, #tpu.memory_space<vmem>>, vector<8x1xf32>,
      %cst_37 = arith.constant 0.000000e+00 : f32
      %69 = vector.broadcast %cst_37 : f32 to vector<8x1xf32>
      %c0_38 = arith.constant 0 : index
      %c0_39 = arith.constant 0 : index
      %70 = vector.load %arg7[%c0_38, %c0_39] : memref<8x1xf32, #tpu.memory_space<vmem>>, vector<8x1xf32>
      tpu.vector_store %arg7[%c0_38, %c0_39], %69 {strides = array<i32>} : memref<8x1xf32, #tpu.memory_space<vmem>>, vector<8x1xf32>,
      %cst_40 = arith.constant 0.000000e+00 : f32
      %71 = vector.broadcast %cst_40 : f32 to vector<8x1xf32>
      %c0_41 = arith.constant 0 : index
      %c0_42 = arith.constant 0 : index
      %72 = vector.load %arg8[%c0_41, %c0_42] : memref<8x1xf32, #tpu.memory_space<vmem>>, vector<8x1xf32>
      tpu.vector_store %arg8[%c0_41, %c0_42], %71 {strides = array<i32>} : memref<8x1xf32, #tpu.memory_space<vmem>>, vector<8x1xf32>,
      %cst_43 = arith.constant 0.000000e+00 : f32
      %73 = vector.broadcast %cst_43 : f32 to vector<8x1xf32>
      %c0_44 = arith.constant 0 : index
      %c0_45 = arith.constant 0 : index
      %74 = vector.load %arg9[%c0_44, %c0_45] : memref<8x1xf32, #tpu.memory_space<vmem>>, vector<8x1xf32>
      tpu.vector_store %arg9[%c0_44, %c0_45], %73 {strides = array<i32>} : memref<8x1xf32, #tpu.memory_space<vmem>>, vector<8x1xf32>,
      %cst_46 = arith.constant 0.000000e+00 : f32
      %75 = vector.broadcast %cst_46 : f32 to vector<8x1xf32>
      %c0_47 = arith.constant 0 : index
      %c0_48 = arith.constant 0 : index
      %76 = vector.load %arg10[%c0_47, %c0_48] : memref<8x1xf32, #tpu.memory_space<vmem>>, vector<8x1xf32>
      tpu.vector_store %arg10[%c0_47, %c0_48], %75 {strides = array<i32>} : memref<8x1xf32, #tpu.memory_space<vmem>>, vector<8x1xf32>,
    } else {
    }
    %c8_i32 = arith.constant 8 : i32
    %3 = arith.muli %arg0, %c8_i32 : i32
    %4 = tpu.iota {dimensions = array<i32: 0>} : vector<8x1xi32>
    %5 = vector.broadcast %3 : i32 to vector<8x1xi32>
    %6 = arith.addi %5, %4 : vector<8x1xi32>
    %c20_i32 = arith.constant 20 : i32
    %7 = vector.broadcast %c20_i32 : i32 to vector<8x1xi32>
    %8 = arith.cmpi slt, %6, %7 : vector<8x1xi32>
    %9 = arith.extui %8 : vector<8x1xi1> to vector<8x1xi32>
    %10 = arith.sitofp %9 : vector<8x1xi32> to vector<8x1xf32>
    %c0 = arith.constant 0 : index
    %c0_1 = arith.constant 0 : index
    %11 = vector.load %arg1[%c0, %c0_1] : memref<8x2xi32, #tpu.memory_space<vmem>>, vector<8x2xi32>
    %12 = vector.extract_strided_slice %11 {offsets = [0, 0], sizes = [8, 1], strides = [1, 1]} : vector<8x2xi32> to vector<8x1xi32>
    %13 = vector.extract_strided_slice %11 {offsets = [0, 1], sizes = [8, 1], strides = [1, 1]} : vector<8x2xi32> to vector<8x1xi32>
    %c0_2 = arith.constant 0 : index
    %c0_3 = arith.constant 0 : index
    %14 = vector.load %arg2[%c0_2, %c0_3] : memref<8x1xf32, #tpu.memory_space<vmem>>, vector<8x1xf32>
    %15 = tpu.iota {dimensions = array<i32: 1>} : vector<8x32xi32>
    %16 = vector.broadcast %12 : vector<8x1xi32> to vector<8x32xi32>
    %17 = arith.cmpi eq, %16, %15 : vector<8x32xi32>
    %18 = arith.extui %17 : vector<8x32xi1> to vector<8x32xi32>
    %19 = arith.sitofp %18 : vector<8x32xi32> to vector<8x32xf32>
    %20 = vector.broadcast %13 : vector<8x1xi32> to vector<8x32xi32>
    %21 = arith.cmpi eq, %20, %15 : vector<8x32xi32>
    %22 = arith.extui %21 : vector<8x32xi1> to vector<8x32xi32>
    %23 = arith.sitofp %22 : vector<8x32xi32> to vector<8x32xf32>
    %c0_4 = arith.constant 0 : index
    %c0_5 = arith.constant 0 : index
    %24 = vector.load %arg3[%c0_4, %c0_5] : memref<32x128xf32, #tpu.memory_space<vmem>>, vector<32x128xf32>
    %cst = arith.constant dense<0.000000e+00> : vector<8x128xf32>
    %25 = tpu.matmul %19, %24, %cst {dimension_numbers = #tpu.dot_dimension_numbers<[1], [0], [0], [1], [0, 0, 1, 1], [], []>} : vector<8x32xf32>, vector<32x128xf32>, vector<8x128xf32> -> vector<8x128xf32>
    %c0_6 = arith.constant 0 : index
    %c0_7 = arith.constant 0 : index
    %26 = vector.load %arg4[%c0_6, %c0_7] : memref<32x128xf32, #tpu.memory_space<vmem>>, vector<32x128xf32>
    %cst_8 = arith.constant dense<0.000000e+00> : vector<8x128xf32>
    %27 = tpu.matmul %23, %26, %cst_8 {dimension_numbers = #tpu.dot_dimension_numbers<[1], [0], [0], [1], [0, 0, 1, 1], [], []>} : vector<8x32xf32>, vector<32x128xf32>, vector<8x128xf32> -> vector<8x128xf32>
    %28 = arith.mulf %25, %27 : vector<8x128xf32>
    %cst_9 = arith.constant dense<0.000000e+00> : vector<8xf32>
    %29 = vector.multi_reduction <add>, %28, %cst_9 [1] : vector<8x128xf32> to vector<8xf32>
    %30 = vector.shape_cast %29 : vector<8xf32> to vector<8x1xf32>
    %31 = vector.extract_strided_slice %25 {offsets = [0, 32], sizes = [8, 1], strides = [1, 1]} : vector<8x128xf32> to vector<8x1xf32>
    %32 = vector.extract_strided_slice %27 {offsets = [0, 33], sizes = [8, 1], strides = [1, 1]} : vector<8x128xf32> to vector<8x1xf32>
    %33 = math.log %14 : vector<8x1xf32>
    %cst_10 = arith.constant 4.60517025 : f32
    %34 = vector.broadcast %cst_10 : f32 to vector<8x1xf32>
    %35 = arith.subf %33, %34 : vector<8x1xf32>
    %cst_11 = arith.constant 7.500000e-01 : f32
    %36 = vector.broadcast %cst_11 : f32 to vector<8x1xf32>
    %37 = arith.mulf %36, %35 : vector<8x1xf32>
    %38 = math.exp %37 : vector<8x1xf32>
    %cst_12 = arith.constant 1.000000e+00 : f32
    %39 = vector.broadcast %cst_12 : f32 to vector<8x1xf32>
    %40 = arith.minimumf %38, %39 : vector<8x1xf32>
    %41 = arith.mulf %40, %10 : vector<8x1xf32>
    %42 = arith.subf %30, %33 : vector<8x1xf32>
    %43 = arith.addf %31, %32 : vector<8x1xf32>
    %44 = arith.mulf %43, %10 : vector<8x1xf32>
    %c0_13 = arith.constant 0 : index
    %c0_14 = arith.constant 0 : index
    %45 = vector.load %arg6[%c0_13, %c0_14] : memref<8x1xf32, #tpu.memory_space<vmem>>, vector<8x1xf32>
    %46 = arith.addf %45, %41 : vector<8x1xf32>
    %c0_15 = arith.constant 0 : index
    %c0_16 = arith.constant 0 : index
    %47 = vector.load %arg6[%c0_15, %c0_16] : memref<8x1xf32, #tpu.memory_space<vmem>>, vector<8x1xf32>
    tpu.vector_store %arg6[%c0_15, %c0_16], %46 {strides = array<i32>} : memref<8x1xf32, #tpu.memory_space<vmem>>, vector<8x1xf32>,
    %c0_17 = arith.constant 0 : index
    %c0_18 = arith.constant 0 : index
    %48 = vector.load %arg7[%c0_17, %c0_18] : memref<8x1xf32, #tpu.memory_space<vmem>>, vector<8x1xf32>
    %49 = arith.mulf %41, %42 : vector<8x1xf32>
    %50 = arith.addf %48, %49 : vector<8x1xf32>
    %c0_19 = arith.constant 0 : index
    %c0_20 = arith.constant 0 : index
    %51 = vector.load %arg7[%c0_19, %c0_20] : memref<8x1xf32, #tpu.memory_space<vmem>>, vector<8x1xf32>
    tpu.vector_store %arg7[%c0_19, %c0_20], %50 {strides = array<i32>} : memref<8x1xf32, #tpu.memory_space<vmem>>, vector<8x1xf32>,
    %c0_21 = arith.constant 0 : index
    %c0_22 = arith.constant 0 : index
    %52 = vector.load %arg8[%c0_21, %c0_22] : memref<8x1xf32, #tpu.memory_space<vmem>>, vector<8x1xf32>
    %53 = arith.mulf %41, %42 : vector<8x1xf32>
    %54 = arith.mulf %53, %42 : vector<8x1xf32>
    %55 = arith.addf %52, %54 : vector<8x1xf32>
    %c0_23 = arith.constant 0 : index
    %c0_24 = arith.constant 0 : index
    %56 = vector.load %arg8[%c0_23, %c0_24] : memref<8x1xf32, #tpu.memory_space<vmem>>, vector<8x1xf32>
    tpu.vector_store %arg8[%c0_23, %c0_24], %55 {strides = array<i32>} : memref<8x1xf32, #tpu.memory_space<vmem>>, vector<8x1xf32>,
    %c0_25 = arith.constant 0 : index
    %c0_26 = arith.constant 0 : index
    %57 = vector.load %arg9[%c0_25, %c0_26] : memref<8x1xf32, #tpu.memory_space<vmem>>, vector<8x1xf32>
    %58 = arith.addf %57, %44 : vector<8x1xf32>
    %c0_27 = arith.constant 0 : index
    %c0_28 = arith.constant 0 : index
    %59 = vector.load %arg9[%c0_27, %c0_28] : memref<8x1xf32, #tpu.memory_space<vmem>>, vector<8x1xf32>
    tpu.vector_store %arg9[%c0_27, %c0_28], %58 {strides = array<i32>} : memref<8x1xf32, #tpu.memory_space<vmem>>, vector<8x1xf32>,
    %c0_29 = arith.constant 0 : index
    %c0_30 = arith.constant 0 : index
    %60 = vector.load %arg10[%c0_29, %c0_30] : memref<8x1xf32, #tpu.memory_space<vmem>>, vector<8x1xf32>
    %61 = arith.mulf %44, %44 : vector<8x1xf32>
    %62 = arith.addf %60, %61 : vector<8x1xf32>
    %c0_31 = arith.constant 0 : index
    %c0_32 = arith.constant 0 : index
    %63 = vector.load %arg10[%c0_31, %c0_32] : memref<8x1xf32, #tpu.memory_space<vmem>>, vector<8x1xf32>
    tpu.vector_store %arg10[%c0_31, %c0_32], %62 {strides = array<i32>} : memref<8x1xf32, #tpu.memory_space<vmem>>, vector<8x1xf32>,
    %c2_i32 = arith.constant 2 : i32
    %64 = arith.cmpi eq, %arg0, %c2_i32 : i32
    %65 = arith.extui %64 : i1 to i32
    %c0_i32_33 = arith.constant 0 : i32
    %66 = arith.cmpi ne, %65, %c0_i32_33 : i32
    scf.if %66 {
      %c0_34 = arith.constant 0 : index
      %c0_35 = arith.constant 0 : index
      %67 = vector.load %arg6[%c0_34, %c0_35] : memref<8x1xf32, #tpu.memory_space<vmem>>, vector<8x1xf32>
      %68 = vector.shape_cast %67 : vector<8x1xf32> to vector<1x8x1xf32>
      %cst_36 = arith.constant dense<0.000000e+00> : vector<1xf32>
      %69 = vector.multi_reduction <add>, %68, %cst_36 [1, 2] : vector<1x8x1xf32> to vector<1xf32>
      %70 = vector.shape_cast %69 : vector<1xf32> to vector<1x1x1xf32>
      %71 = vector.extract %70[0, 0, 0] : f32 from vector<1x1x1xf32>
      %72 = vector.broadcast %71 : f32 to vector<1x1xf32>
      %c0_37 = arith.constant 0 : index
      %c0_38 = arith.constant 0 : index
      %73 = vector.load %arg7[%c0_37, %c0_38] : memref<8x1xf32, #tpu.memory_space<vmem>>, vector<8x1xf32>
      %74 = vector.shape_cast %73 : vector<8x1xf32> to vector<1x8x1xf32>
      %cst_39 = arith.constant dense<0.000000e+00> : vector<1xf32>
      %75 = vector.multi_reduction <add>, %74, %cst_39 [1, 2] : vector<1x8x1xf32> to vector<1xf32>
      %76 = vector.shape_cast %75 : vector<1xf32> to vector<1x1x1xf32>
      %77 = vector.extract %76[0, 0, 0] : f32 from vector<1x1x1xf32>
      %78 = vector.broadcast %77 : f32 to vector<1x1xf32>
      %c0_40 = arith.constant 0 : index
      %c0_41 = arith.constant 0 : index
      %79 = vector.load %arg8[%c0_40, %c0_41] : memref<8x1xf32, #tpu.memory_space<vmem>>, vector<8x1xf32>
      %80 = vector.shape_cast %79 : vector<8x1xf32> to vector<1x8x1xf32>
      %cst_42 = arith.constant dense<0.000000e+00> : vector<1xf32>
      %81 = vector.multi_reduction <add>, %80, %cst_42 [1, 2] : vector<1x8x1xf32> to vector<1xf32>
      %82 = vector.shape_cast %81 : vector<1xf32> to vector<1x1x1xf32>
      %83 = vector.extract %82[0, 0, 0] : f32 from vector<1x1x1xf32>
      %84 = vector.broadcast %83 : f32 to vector<1x1xf32>
      %c0_43 = arith.constant 0 : index
      %c0_44 = arith.constant 0 : index
      %85 = vector.load %arg9[%c0_43, %c0_44] : memref<8x1xf32, #tpu.memory_space<vmem>>, vector<8x1xf32>
      %86 = vector.shape_cast %85 : vector<8x1xf32> to vector<1x8x1xf32>
      %cst_45 = arith.constant dense<0.000000e+00> : vector<1xf32>
      %87 = vector.multi_reduction <add>, %86, %cst_45 [1, 2] : vector<1x8x1xf32> to vector<1xf32>
      %88 = vector.shape_cast %87 : vector<1xf32> to vector<1x1x1xf32>
      %89 = vector.extract %88[0, 0, 0] : f32 from vector<1x1x1xf32>
      %90 = vector.broadcast %89 : f32 to vector<1x1xf32>
      %c0_46 = arith.constant 0 : index
      %c0_47 = arith.constant 0 : index
      %91 = vector.load %arg10[%c0_46, %c0_47] : memref<8x1xf32, #tpu.memory_space<vmem>>, vector<8x1xf32>
      %92 = vector.shape_cast %91 : vector<8x1xf32> to vector<1x8x1xf32>
      %cst_48 = arith.constant dense<0.000000e+00> : vector<1xf32>
      %93 = vector.multi_reduction <add>, %92, %cst_48 [1, 2] : vector<1x8x1xf32> to vector<1xf32>
      %94 = vector.shape_cast %93 : vector<1xf32> to vector<1x1x1xf32>
      %95 = vector.extract %94[0, 0, 0] : f32 from vector<1x1x1xf32>
      %96 = vector.broadcast %95 : f32 to vector<1x1xf32>
      %cst_49 = arith.constant 2.000000e+01 : f32
      %97 = vector.broadcast %cst_49 : f32 to vector<1x1xf32>
      %98 = arith.mulf %97, %84 : vector<1x1xf32>
      %cst_50 = arith.constant 2.000000e+00 : f32
      %99 = vector.broadcast %cst_50 : f32 to vector<1x1xf32>
      %100 = arith.mulf %99, %78 : vector<1x1xf32>
      %101 = arith.mulf %100, %90 : vector<1x1xf32>
      %102 = arith.addf %98, %101 : vector<1x1xf32>
      %103 = arith.mulf %72, %96 : vector<1x1xf32>
      %104 = arith.addf %102, %103 : vector<1x1xf32>
      %cst_51 = arith.constant 2.000000e+01 : f32
      %cst_52 = arith.constant 2.000000e+01 : f32
      %105 = arith.mulf %cst_51, %cst_52 : f32
      %106 = vector.broadcast %105 : f32 to vector<1x1xf32>
      %107 = arith.divf %104, %106 : vector<1x1xf32>
      %c0_53 = arith.constant 0 : index
      %c0_54 = arith.constant 0 : index
      %108 = vector.load %arg5[%c0_53, %c0_54] : memref<1x1xf32, #tpu.memory_space<vmem>>, vector<1x1xf32>
      tpu.vector_store %arg5[%c0_53, %c0_54], %107 {strides = array<i32>} : memref<1x1xf32, #tpu.memory_space<vmem>>, vector<1x1xf32>,
    } else {
    }
    return
  }
  func.func @transform_0(%arg0: i32) -> (i32, i32) {
    %c0_i32 = arith.constant 0 : i32
    %c0_i32_0 = arith.constant 0 : i32
    return %arg0, %c0_i32 : i32, i32
  }
  func.func @transform_1(%arg0: i32) -> (i32, i32) {
    %c0_i32 = arith.constant 0 : i32
    %c0_i32_0 = arith.constant 0 : i32
    return %arg0, %c0_i32 : i32, i32
  }
  func.func @transform_2(%arg0: i32) -> (i32, i32) {
    %c0_i32 = arith.constant 0 : i32
    %c0_i32_0 = arith.constant 0 : i32
    %c0_i32_1 = arith.constant 0 : i32
    return %c0_i32, %c0_i32_0 : i32, i32
  }
  func.func @transform_3(%arg0: i32) -> (i32, i32) {
    %c0_i32 = arith.constant 0 : i32
    %c0_i32_0 = arith.constant 0 : i32
    %c0_i32_1 = arith.constant 0 : i32
    return %c0_i32, %c0_i32_0 : i32, i32
  }
  func.func @transform_4(%arg0: i32) -> (i32, i32) {
    %c0_i32 = arith.constant 0 : i32
    %c0_i32_0 = arith.constant 0 : i32
    %c0_i32_1 = arith.constant 0 : i32
    return %c0_i32, %c0_i32_0 : i32, i32
  }
}

</mosaic_0001>

<llo_original>
// kernel: tpu_custom_call.1
$region0: #{tpu_custom_call.1}
  #allocation0 [shape = 'u32[]', space=smem, size = 0x4, offset = 0x4, fixed_abs, tag = 'smem constant byte address 0x4 - core index']
  #allocation1 [shape = 'u32[144,128]{1,0:T(1,128)}', space=vmem, size = 0x12000, scoped, tag = 'internal scratch']
  #allocation2 [shape = 'f32[8,1]{1,0:T(8,128)}', space=vmem, size = 0x1000, scoped, tag = 'scratch operand']
  #allocation3 [shape = 'f32[8,1]{1,0:T(8,128)}', space=vmem, size = 0x1000, scoped, tag = 'scratch operand']
  #allocation4 [shape = 'f32[8,1]{1,0:T(8,128)}', space=vmem, size = 0x1000, scoped, tag = 'scratch operand']
  #allocation5 [shape = 'f32[8,1]{1,0:T(8,128)}', space=vmem, size = 0x1000, scoped, tag = 'scratch operand']
  #allocation6 [shape = 'f32[8,1]{1,0:T(8,128)}', space=vmem, size = 0x1000, scoped, tag = 'scratch operand']
  %s0 = inlined_call_operand.vmem [shape: s32[24,2], index: 0, kind: input, shape index: {}]
  %s1 = inlined_call_operand.vmem [shape: f32[24,1], index: 1, kind: input, shape index: {}]
  %s2 = inlined_call_operand.vmem [shape: f32[32,128], index: 2, kind: input, shape index: {}]
  %s3 = inlined_call_operand.hbm [shape: f32[32,128], index: 3, kind: input, shape index: {}]
  %s4 = inlined_call_operand.hbm [shape: f32[1,1], index: 4, kind: output, shape index: {}]
  %s5 = sld [smem:[#allocation0]]
  $region61: #{tpu_custom_call.1} parent=0
    _
  %s7 = ssub.s32 1, %s5
  %s8 = scalar_select 0, %s7, %s5
  $region1: #{tpu_custom_call.1} parent=0
    #allocation7 [shape = 'u8[16384]{0}', space=vmem, size = 0x4000, scoped, tag = 'input window, operand 3, single buffered']
    #allocation8 [shape = 's32[2]{0}', space=sflag, size = 0x8, scoped, tag = 'scoped memory for tpu_custom_call.1']
    #allocation9 [shape = 's32[2]{0}', space=sflag, size = 0x8, scoped, tag = 'scoped memory for tpu_custom_call.1']
    #allocation10 [shape = 'u8[512]{0}', space=vmem, size = 0x400, scoped, tag = 'output window, operand 0, single buffered']
    %9 = vsyncpa [#allocation8], 0
    %10 = vsyncpa [#allocation9], 0
    loop: start=0, step=1, limit=5
    $region2: #{tpu_custom_call.1} parent=1 // loop_pre_header
      _
    $region3: #{tpu_custom_call.1} parent=1 // loop_header
      %s12 = sphi 0, %s16
      %p13 = scmp.ge.s32.totalorder %s12, 5
      %s22 = sphi 0, %s24
      %s25 = sphi 0, %s22
      %s26 = sphi 0, %s25
      %s42 = sphi 0, %s26
      %s48 = sphi 0, %s50
      %s51 = sphi 0, %s48
      %s52 = sphi 0, %s51
      %s68 = sphi 0, %s52
      %s72 = sphi 0, %s72
      %s74 = sphi 0, %s72
      %s75 = sphi 0, %s74
      %s89 = sphi 0, %s75
      %s93 = sphi 0, %s93
      %s95 = sphi 0, %s93
      %s96 = sphi 0, %s95
      %s110 = sphi 0, %s96
      %s114 = sphi 0, %s114
      %s116 = sphi 0, %s114
      %s117 = sphi 0, %s116
      %s131 = sphi 0, %s117
    $region4: #{tpu_custom_call.1} parent=1 // loop_header_branch
      %15 = sbr.rel (%p13) target = $region8
    $region5: #{tpu_custom_call.1} parent=1 // loop_body
      %s17 = ssub.s32 %s12, 1
      %s18 = ssub.s32 %s12, 2
      %s19 = sadd.s32 %s12, 1
      %s20 = ssub.s32 %s12, %s19
      %p21 = scmp.eq.s32.totalorder %s20, 0
      %s23 = sadd.s32 %s22, 1
      %s24 = scalar_select %p21, %s22, %s23
      %p27 = pneg %p21
      %p28 = scmp.eq.s32.totalorder %s12, 2
      %p29 = por %p27, %p28
      %p30 = scmp.ne.s32.totalorder %s22, %s25
      %p31 = scmp.eq.s32.totalorder %s12, 0
      %p32 = por %p30, %p31
      %p33 = scmp.ne.s32.totalorder %s22, %s25
      %p34 = scmp.eq.s32.totalorder %s17, 2
      %p35 = por %p33, %p34
      %p36 = scmp.ne.s32.totalorder %s25, %s26
      %p37 = scmp.eq.s32.totalorder %s17, 0
      %p38 = por %p36, %p37
      %p39 = scmp.ne.s32.totalorder %s25, %s26
      %p40 = scmp.eq.s32.totalorder %s18, 2
      %p41 = por %p39, %p40
      %p43 = scmp.ne.s32.totalorder %s26, %s42
      %p44 = scmp.eq.s32.totalorder %s18, 0
      %p45 = por %p43, %p44
      %s46 = ssub.s32 %s12, %s19
      %p47 = scmp.eq.s32.totalorder %s46, 0
      %s49 = sadd.s32 %s48, 1
      %s50 = scalar_select %p47, %s48, %s49
      %p53 = pneg %p47
      %p54 = scmp.eq.s32.totalorder %s12, 2
      %p55 = por %p53, %p54
      %p56 = scmp.ne.s32.totalorder %s48, %s51
      %p57 = scmp.eq.s32.totalorder %s12, 0
      %p58 = por %p56, %p57
      %p59 = scmp.ne.s32.totalorder %s48, %s51
      %p60 = scmp.eq.s32.totalorder %s17, 2
      %p61 = por %p59, %p60
      %p62 = scmp.ne.s32.totalorder %s51, %s52
      %p63 = scmp.eq.s32.totalorder %s17, 0
      %p64 = por %p62, %p63
      %p65 = scmp.ne.s32.totalorder %s51, %s52
      %p66 = scmp.eq.s32.totalorder %s18, 2
      %p67 = por %p65, %p66
      %p69 = scmp.ne.s32.totalorder %s52, %s68
      %p70 = scmp.eq.s32.totalorder %s18, 0
      %p71 = por %p69, %p70
      %s73 = sadd.s32 %s72, 1
      %p76 = scmp.eq.s32.totalorder %s12, 2
      %p77 = scmp.ne.s32.totalorder %s72, %s74
      %p78 = scmp.eq.s32.totalorder %s12, 0
      %p79 = por %p77, %p78
      %p80 = scmp.ne.s32.totalorder %s72, %s74
      %p81 = scmp.eq.s32.totalorder %s17, 2
      %p82 = por %p80, %p81
      %p83 = scmp.ne.s32.totalorder %s74, %s75
      %p84 = scmp.eq.s32.totalorder %s17, 0
      %p85 = por %p83, %p84
      %p86 = scmp.ne.s32.totalorder %s74, %s75
      %p87 = scmp.eq.s32.totalorder %s18, 2
      %p88 = por %p86, %p87
      %p90 = scmp.ne.s32.totalorder %s75, %s89
      %p91 = scmp.eq.s32.totalorder %s18, 0
      %p92 = por %p90, %p91
      %s94 = sadd.s32 %s93, 1
      %p97 = scmp.eq.s32.totalorder %s12, 2
      %p98 = scmp.ne.s32.totalorder %s93, %s95
      %p99 = scmp.eq.s32.totalorder %s12, 0
      %p100 = por %p98, %p99
      %p101 = scmp.ne.s32.totalorder %s93, %s95
      %p102 = scmp.eq.s32.totalorder %s17, 2
      %p103 = por %p101, %p102
      %p104 = scmp.ne.s32.totalorder %s95, %s96
      %p105 = scmp.eq.s32.totalorder %s17, 0
      %p106 = por %p104, %p105
      %p107 = scmp.ne.s32.totalorder %s95, %s96
      %p108 = scmp.eq.s32.totalorder %s18, 2
      %p109 = por %p107, %p108
      %p111 = scmp.ne.s32.totalorder %s96, %s110
      %p112 = scmp.eq.s32.totalorder %s18, 0
      %p113 = por %p111, %p112
      %s115 = sadd.s32 %s114, 1
      %p118 = scmp.eq.s32.totalorder %s12, 2
      %p119 = scmp.ne.s32.totalorder %s114, %s116
      %p120 = scmp.eq.s32.totalorder %s12, 0
      %p121 = por %p119, %p120
      %p122 = scmp.ne.s32.totalorder %s114, %s116
      %p123 = scmp.eq.s32.totalorder %s17, 2
      %p124 = por %p122, %p123
      %p125 = scmp.ne.s32.totalorder %s116, %s117
      %p126 = scmp.eq.s32.totalorder %s17, 0
      %p127 = por %p125, %p126
      %p128 = scmp.ne.s32.totalorder %s116, %s117
      %p129 = scmp.eq.s32.totalorder %s18, 2
      %p130 = por %p128, %p129
      %p132 = scmp.ne.s32.totalorder %s117, %s131
      %p133 = scmp.eq.s32.totalorder %s18, 0
      %p134 = por %p132, %p133
      %p135 = scmp.le.s32.totalorder 1, %s12
      %p136 = scmp.lt.s32.totalorder %s12, 4
      %p137 = pnand %p135, %p136
      %p138 = pneg %p137
      // Predicated region
      $region9: #{tpu_custom_call.1} parent=5 // pred_check
        _
      $region10: #{tpu_custom_call.1} parent=5 // pred_check_branch
        %140 = sbr.rel (%p137) target = $region12
      $region11: #{tpu_custom_call.1} parent=5 // pred_region
        %s141 = ssub.s32 %s12, 1
        // Predicated region
        $region13: #{tpu_custom_call.1} parent=11 // pred_check
          %p142 = pneg %p85
        $region14: #{tpu_custom_call.1} parent=11 // pred_check_branch
          %144 = sbr.rel (%p142) target = $region16
        $region15: #{tpu_custom_call.1} parent=11 // pred_region
          _
        $region16: #{tpu_custom_call.1} parent=11 // pred_fallthru
          _
        // Predicated region
        $region17: #{tpu_custom_call.1} parent=11 // pred_check
          %p145 = pneg %p106
        $region18: #{tpu_custom_call.1} parent=11 // pred_check_branch
          %147 = sbr.rel (%p145) target = $region20
        $region19: #{tpu_custom_call.1} parent=11 // pred_region
          %s149 = ssub.s32 512, 512
          %150 = vsyncadd [#allocation8], %s149
          %s151 = sshll.u32 [#allocation7], 4
          %s152 = int_to_ptr.vmem [resolvable:$true] %s151
          %157 = dma.hbm_to_vmem [thread:$0]  %s3, 512, %s152, [#allocation8], 128, 128, 8
        $region20: #{tpu_custom_call.1} parent=11 // pred_fallthru
          _
      $region12: #{tpu_custom_call.1} parent=5 // pred_fallthru
        _
      %p158 = scmp.lt.s32.totalorder %s12, 3
      // Predicated region
      $region21: #{tpu_custom_call.1} parent=5 // pred_check
        %p159 = pneg %p158
      $region22: #{tpu_custom_call.1} parent=5 // pred_check_branch
        %161 = sbr.rel (%p159) target = $region24
      $region23: #{tpu_custom_call.1} parent=5 // pred_region
        // Predicated region
        $region25: #{tpu_custom_call.1} parent=23 // pred_check
          %p162 = pneg %p32
        $region26: #{tpu_custom_call.1} parent=23 // pred_check_branch
          %164 = sbr.rel (%p162) target = $region28
        $region27: #{tpu_custom_call.1} parent=23 // pred_region
          %p165 = scmp.lt.s32.totalorder %s12, 2
          %s166 = scalar_select %p165, %s12, 2
          %s167 = smul.addr %s166, 8
          %s168 = scalar_lea.vmem %s0, %s167
        $region28: #{tpu_custom_call.1} parent=23 // pred_fallthru
          _
        // Predicated region
        $region29: #{tpu_custom_call.1} parent=23 // pred_check
          %p169 = pneg %p58
        $region30: #{tpu_custom_call.1} parent=23 // pred_check_branch
          %171 = sbr.rel (%p169) target = $region32
        $region31: #{tpu_custom_call.1} parent=23 // pred_region
          %p172 = scmp.lt.s32.totalorder %s12, 2
          %s173 = scalar_select %p172, %s12, 2
          %s174 = smul.addr %s173, 8
          %s175 = scalar_lea.vmem %s1, %s174
        $region32: #{tpu_custom_call.1} parent=23 // pred_fallthru
          _
      $region24: #{tpu_custom_call.1} parent=5 // pred_fallthru
        _
      %p176 = scmp.le.s32.totalorder 1, %s12
      %p177 = scmp.lt.s32.totalorder %s12, 4
      %p178 = pnand %p176, %p177
      %p179 = pneg %p178
      // Predicated region
      $region33: #{tpu_custom_call.1} parent=5 // pred_check
        _
      $region34: #{tpu_custom_call.1} parent=5 // pred_check_branch
        %181 = sbr.rel (%p178) target = $region36
      $region35: #{tpu_custom_call.1} parent=5 // pred_region
        %s182 = ssub.s32 %s12, 1
        // Predicated region
        $region37: #{tpu_custom_call.1} parent=35 // pred_check
          %p183 = pneg %p106
        $region38: #{tpu_custom_call.1} parent=35 // pred_check_branch
          %185 = sbr.rel (%p183) target = $region40
        $region39: #{tpu_custom_call.1} parent=35 // pred_region
          %186 = dma.done [#allocation8], 512
        $region40: #{tpu_custom_call.1} parent=35 // pred_fallthru
          _
        %p187 = scmp.lt.s32.totalorder %s17, 2
        %s188 = scalar_select %p187, %s17, 2
        %s189 = smul.addr %s188, 8
        %s190 = scalar_lea.vmem %s0, %s189
        %p191 = pneg %p38
        %p192 = pneg %p35
        %p193 = scmp.lt.s32.totalorder %s17, 2
        %s194 = scalar_select %p193, %s17, 2
        %s195 = smul.addr %s194, 8
        %s196 = scalar_lea.vmem %s1, %s195
        %p197 = pneg %p64
        %p198 = pneg %p61
        %p199 = pneg %p85
        %p200 = pneg %p82
        %p201 = pneg %p106
        %p202 = pneg %p103
        %p203 = pneg %p127
        %p204 = pneg %p124
        %p205 = scmp.lt.s32.totalorder %s17, 2
        %s206 = scalar_select %p205, %s17, 2
        %s207 = smul.addr %s206, 8
        %s208 = scalar_lea.vmem %s0, %s207
        %p209 = scmp.lt.s32.totalorder %s17, 2
        %s210 = scalar_select %p209, %s17, 2
        %s211 = smul.addr %s210, 8
        %s212 = scalar_lea.vmem %s1, %s211
        %p213 = scmp.eq.s32.totalorder %s17, 0
        // Predicated region
        $region41: #{tpu_custom_call.1} parent=35 // pred_check
          %p214 = pneg %p213
        $region42: #{tpu_custom_call.1} parent=35 // pred_check_branch
          %216 = sbr.rel (%p214) target = $region44
        $region43: #{tpu_custom_call.1} parent=35 // pred_region
          %vm217 = vcmask 7168
          %218 = vst.msk [vmem:[#allocation2] sm:$0xff] %vm217, 0.0
          %219 = vst.msk [vmem:[#allocation3] sm:$0xff] %vm217, 0.0
          %220 = vst.msk [vmem:[#allocation4] sm:$0xff] %vm217, 0.0
          %221 = vst.msk [vmem:[#allocation5] sm:$0xff] %vm217, 0.0
          %222 = vst.msk [vmem:[#allocation6] sm:$0xff] %vm217, 0.0
        $region44: #{tpu_custom_call.1} parent=35 // pred_fallthru
          _
        %s223 = smul.u32 %s17, 8
        %v224 = vlaneseq
        %v225 = vshrl.u32 %v224, 7
        %v226 = vstv %s223
        %v227 = vadd.s32 %v226, %v225
        %vm228 = vcmp.lt.s32.totalorder %v227, 20
        %v229 = vsel %vm228, 1, 0
        %v230 = vcvt.s32.f32 %v229
        %v231 = vld [vmem:[%s208] sm:$0xff]
        %v232 = vld [vmem:[%s212] sm:$0xff]
        %v233 = vlaneseq
        %v234 = vand.u32 %v233, 127
        %235 = vset.pattern.permute.xlu0 0
        %236 = vperm.xlu0 %235, %v231
        %v237 = vpop.permute.xlu0 %236
        %vm238 = vcmp.eq.s32.totalorder %v237, %v234
        %v239 = vsel %vm238, 1, 0
        %v240 = vcvt.s32.f32 %v239
        %241 = vset.pattern.permute.xlu0 1
        %242 = vperm.xlu0 %241, %v231
        %v243 = vpop.permute.xlu0 %242
        %vm244 = vcmp.eq.s32.totalorder %v243, %v234
        %v245 = vsel %vm244, 1, 0
        %v246 = vcvt.s32.f32 %v245
        %v247 = vld [vmem:[%s2] sm:$0xff]
        %v248 = vld [vmem:[%s2 + $0x8] sm:$0xff]
        %v249 = vld [vmem:[%s2 + $0x10] sm:$0xff]
        %v250 = vld [vmem:[%s2 + $0x18] sm:$0xff]
        %vm251 = vcmask 261120
        %v253 = vsel %vm251, %v240, 0
        %255 = vmatprep.subr.mxu0 0.0
        %256 = vmatpush1.msra.mxu0 %v247
        %257 = vmatprep.subr.mxu0 0.0
        %258 = vmatpush1.msra.mxu0 %v248
        %259 = vmatprep.subr.mxu0 0.0
        %260 = vmatpush1.msra.mxu0 %v249
        %261 = vmatprep.subr.mxu0 0.0
        %262 = vmatpush1.msra.mxu0 %v250
        %263 = vmatprep.subr.mxu0 0.0
        %264 = vmatpush1.msra.mxu0 0.0
        %265 = vmatprep.subr.mxu0 0.0
        %266 = vmatpush1.msra.mxu0 0.0
        %267 = vmatprep.subr.mxu0 0.0
        %268 = vmatpush1.msra.mxu0 0.0
        %269 = vmatprep.subr.mxu0 0.0
        %270 = vmatpush1.msra.mxu0 0.0
        %271 = vmatprep.subr.mxu0 0.0
        %272 = vmatpush1.msra.mxu0 0.0
        %273 = vmatprep.subr.mxu0 0.0
        %274 = vmatpush1.msra.mxu0 0.0
        %275 = vmatprep.subr.mxu0 0.0
        %276 = vmatpush1.msra.mxu0 0.0
        %277 = vmatprep.subr.mxu0 0.0
        %278 = vmatpush1.msra.mxu0 0.0
        %279 = vmatprep.subr.mxu0 0.0
        %280 = vmatpush1.msra.mxu0 0.0
        %281 = vmatprep.subr.mxu0 0.0
        %282 = vmatpush1.msra.mxu0 0.0
        %283 = vmatprep.subr.mxu0 0.0
        %284 = vmatpush1.msra.mxu0 0.0
        %285 = vmatprep.subr.mxu0 0.0
        %286 = vmatpush1.msra.mxu0 0.0
        %287 = vmatprep.subr.mxu0 0.0
        %288 = vmatpush1.msra.mxu0 0.0
        %289 = vmatprep.subr.mxu0 0.0
        %290 = vmatpush1.msra.mxu0 0.0
        %291 = vmatprep.subr.mxu0 0.0
        %292 = vmatpush1.msra.mxu0 0.0
        %293 = vmatprep.subr.mxu0 0.0
        %294 = vmatpush1.msra.mxu0 0.0
        %295 = vmatprep.subr.mxu0 0.0
        %296 = vmatpush1.msra.mxu0 0.0
        %297 = vmatprep.subr.mxu0 0.0
        %298 = vmatpush1.msra.mxu0 0.0
        %299 = vmatprep.subr.mxu0 0.0
        %300 = vmatpush1.msra.mxu0 0.0
        %301 = vmatprep.subr.mxu0 0.0
        %302 = vmatpush1.msra.mxu0 0.0
        %303 = vmatprep.subr.mxu0 0.0
        %304 = vmatpush1.msra.mxu0 0.0
        %305 = vmatprep.subr.mxu0 0.0
        %306 = vmatpush1.msra.mxu0 0.0
        %307 = vmatprep.subr.mxu0 0.0
        %308 = vmatpush1.msra.mxu0 0.0
        %309 = vmatprep.subr.mxu0 0.0
        %310 = vmatpush1.msra.mxu0 0.0
        %311 = vmatprep.subr.mxu0 0.0
        %312 = vmatpush1.msra.mxu0 0.0
        %313 = vmatprep.subr.mxu0 0.0
        %314 = vmatpush1.msra.mxu0 0.0
        %315 = vmatprep.subr.mxu0 0.0
        %316 = vmatpush1.msra.mxu0 0.0
        %317 = vmatprep.subr.mxu0 0.0
        %318 = vmatpush1.msra.mxu0 0.0
        %319 = vmatprep.mubr.f32.mxu0 0.0
        %320 = vmatmul.mubr.f32.gmra.mrb[0].mxu0 %v253
        %v321 = vpop.f32.mrb[0].mxu0
        %v322 = vadd.f32 0.0, %v321
        %v323 = vpop.f32.mrb[0].mxu0
        %324 = vdwg.mxu0
        %v325 = vld [vmem:[#allocation7] sm:$0xff]
        %v326 = vld [vmem:[#allocation7 + $0x8] sm:$0xff]
        %v327 = vld [vmem:[#allocation7 + $0x10] sm:$0xff]
        %v328 = vld [vmem:[#allocation7 + $0x18] sm:$0xff]
        %v330 = vsel %vm251, %v246, 0
        %332 = vmatprep.subr.mxu0 0.0
        %333 = vmatpush1.msra.mxu0 %v325
        %334 = vmatprep.subr.mxu0 0.0
        %335 = vmatpush1.msra.mxu0 %v326
        %336 = vmatprep.subr.mxu0 0.0
        %337 = vmatpush1.msra.mxu0 %v327
        %338 = vmatprep.subr.mxu0 0.0
        %339 = vmatpush1.msra.mxu0 %v328
        %340 = vmatprep.subr.mxu0 0.0
        %341 = vmatpush1.msra.mxu0 0.0
        %342 = vmatprep.subr.mxu0 0.0
        %343 = vmatpush1.msra.mxu0 0.0
        %344 = vmatprep.subr.mxu0 0.0
        %345 = vmatpush1.msra.mxu0 0.0
        %346 = vmatprep.subr.mxu0 0.0
        %347 = vmatpush1.msra.mxu0 0.0
        %348 = vmatprep.subr.mxu0 0.0
        %349 = vmatpush1.msra.mxu0 0.0
        %350 = vmatprep.subr.mxu0 0.0
        %351 = vmatpush1.msra.mxu0 0.0
        %352 = vmatprep.subr.mxu0 0.0
        %353 = vmatpush1.msra.mxu0 0.0
        %354 = vmatprep.subr.mxu0 0.0
        %355 = vmatpush1.msra.mxu0 0.0
        %356 = vmatprep.subr.mxu0 0.0
        %357 = vmatpush1.msra.mxu0 0.0
        %358 = vmatprep.subr.mxu0 0.0
        %359 = vmatpush1.msra.mxu0 0.0
        %360 = vmatprep.subr.mxu0 0.0
        %361 = vmatpush1.msra.mxu0 0.0
        %362 = vmatprep.subr.mxu0 0.0
        %363 = vmatpush1.msra.mxu0 0.0
        %364 = vmatprep.subr.mxu0 0.0
        %365 = vmatpush1.msra.mxu0 0.0
        %366 = vmatprep.subr.mxu0 0.0
        %367 = vmatpush1.msra.mxu0 0.0
        %368 = vmatprep.subr.mxu0 0.0
        %369 = vmatpush1.msra.mxu0 0.0
        %370 = vmatprep.subr.mxu0 0.0
        %371 = vmatpush1.msra.mxu0 0.0
        %372 = vmatprep.subr.mxu0 0.0
        %373 = vmatpush1.msra.mxu0 0.0
        %374 = vmatprep.subr.mxu0 0.0
        %375 = vmatpush1.msra.mxu0 0.0
        %376 = vmatprep.subr.mxu0 0.0
        %377 = vmatpush1.msra.mxu0 0.0
        %378 = vmatprep.subr.mxu0 0.0
        %379 = vmatpush1.msra.mxu0 0.0
        %380 = vmatprep.subr.mxu0 0.0
        %381 = vmatpush1.msra.mxu0 0.0
        %382 = vmatprep.subr.mxu0 0.0
        %383 = vmatpush1.msra.mxu0 0.0
        %384 = vmatprep.subr.mxu0 0.0
        %385 = vmatpush1.msra.mxu0 0.0
        %386 = vmatprep.subr.mxu0 0.0
        %387 = vmatpush1.msra.mxu0 0.0
        %388 = vmatprep.subr.mxu0 0.0
        %389 = vmatpush1.msra.mxu0 0.0
        %390 = vmatprep.subr.mxu0 0.0
        %391 = vmatpush1.msra.mxu0 0.0
        %392 = vmatprep.subr.mxu0 0.0
        %393 = vmatpush1.msra.mxu0 0.0
        %394 = vmatprep.subr.mxu0 0.0
        %395 = vmatpush1.msra.mxu0 0.0
        %396 = vmatprep.mubr.f32.mxu0 0.0
        %397 = vmatmul.mubr.f32.gmra.mrb[0].mxu0 %v330
        %v398 = vpop.f32.mrb[0].mxu0
        %v399 = vadd.f32 0.0, %v398
        %v400 = vpop.f32.mrb[0].mxu0
        %401 = vdwg.mxu0
        %v402 = vmul.f32 %v322, %v399
        %403 = vadd.xlane.f32.xlu0 %v402
        %v404 = vpop.xlane.xlu0 %403
        %v405 = vlog2.pop %v232
        %v406 = vmul.f32 %v405, 0.6931472
        %v407 = vsub.f32 %v406, 4.6051702
        %v408 = vmul.f32 %v407, 0.75
        %v409 = vmul.f32 %v408, 1.442695
        %v410 = vpow.pop %v409
        %v411 = vmin.f32 %v410, 1.0
        %v412 = vmul.f32 %v411, %v230
        %v413 = vsub.f32 %v404, %v406
        %415 = vrot.lane.b32.xlu0 %v399, 127
        %v416 = vpop.permute.xlu0 %415
        %v418 = vadd.f32 %v322, %v416
        %v419 = vmul.f32 %v418, %v230
        %v420 = vld [vmem:[#allocation2] sm:$0xff]
        %v421 = vadd.f32 %v420, %v412
        %vm422 = vcmask 7168
        %423 = vst.msk [vmem:[#allocation2] sm:$0xff] %vm422, %v421
        %v424 = vld [vmem:[#allocation3] sm:$0xff]
        %v425 = vmul.f32 %v412, %v413
        %v426 = vadd.f32 %v424, %v425
        %427 = vst.msk [vmem:[#allocation3] sm:$0xff] %vm422, %v426
        %v428 = vld [vmem:[#allocation4] sm:$0xff]
        %v429 = vmul.f32 %v425, %v413
        %v430 = vadd.f32 %v428, %v429
        %431 = vst.msk [vmem:[#allocation4] sm:$0xff] %vm422, %v430
        %v432 = vld [vmem:[#allocation5] sm:$0xff]
        %434 = vrot.lane.b32.xlu0 %v419, 96
        %v435 = vpop.permute.xlu0 %434
        %v437 = vadd.f32 %v432, %v435
        %438 = vst.msk [vmem:[#allocation5] sm:$0xff] %vm422, %v437
        %v439 = vld [vmem:[#allocation6] sm:$0xff]
        %v440 = vmul.f32 %v419, %v419
        %442 = vrot.lane.b32.xlu0 %v440, 96
        %v443 = vpop.permute.xlu0 %442
        %v445 = vadd.f32 %v439, %v443
        %446 = vst.msk [vmem:[#allocation6] sm:$0xff] %vm422, %v445
        %p447 = scmp.eq.s32.totalorder %s17, 2
        // Predicated region
        $region45: #{tpu_custom_call.1} parent=35 // pred_check
          %p448 = pneg %p447
        $region46: #{tpu_custom_call.1} parent=35 // pred_check_branch
          %450 = sbr.rel (%p448) target = $region48
        $region47: #{tpu_custom_call.1} parent=35 // pred_region
          %v451 = vld [vmem:[#allocation2] sm:$0xff]
          %v452 = vsel %vm422, %v451, 0.0
          %453 = vadd.xlane.f32.xlu0 %v452
          %v454 = vpop.xlane.xlu0 %453
          %v455 = vrot.slane %v454, 4
          %v456 = vadd.f32 %v454, %v455
          %v457 = vrot.slane %v456, 2
          %v458 = vadd.f32 %v456, %v457
          %v459 = vrot.slane %v458, 1
          %v460 = vadd.f32 %v458, %v459
          %s461 = vtos %v460
          %v462 = vstv %s461
          %v463 = vld [vmem:[#allocation3] sm:$0xff]
          %v464 = vsel %vm422, %v463, 0.0
          %465 = vadd.xlane.f32.xlu0 %v464
          %v466 = vpop.xlane.xlu0 %465
          %v467 = vrot.slane %v466, 4
          %v468 = vadd.f32 %v466, %v467
          %v469 = vrot.slane %v468, 2
          %v470 = vadd.f32 %v468, %v469
          %v471 = vrot.slane %v470, 1
          %v472 = vadd.f32 %v470, %v471
          %s473 = vtos %v472
          %v474 = vstv %s473
          %v475 = vld [vmem:[#allocation4] sm:$0xff]
          %v476 = vsel %vm422, %v475, 0.0
          %477 = vadd.xlane.f32.xlu0 %v476
          %v478 = vpop.xlane.xlu0 %477
          %v479 = vrot.slane %v478, 4
          %v480 = vadd.f32 %v478, %v479
          %v481 = vrot.slane %v480, 2
          %v482 = vadd.f32 %v480, %v481
          %v483 = vrot.slane %v482, 1
          %v484 = vadd.f32 %v482, %v483
          %s485 = vtos %v484
          %v486 = vstv %s485
          %v487 = vld [vmem:[#allocation5] sm:$0xff]
          %v488 = vsel %vm422, %v487, 0.0
          %489 = vadd.xlane.f32.xlu0 %v488
          %v490 = vpop.xlane.xlu0 %489
          %v491 = vrot.slane %v490, 4
          %v492 = vadd.f32 %v490, %v491
          %v493 = vrot.slane %v492, 2
          %v494 = vadd.f32 %v492, %v493
          %v495 = vrot.slane %v494, 1
          %v496 = vadd.f32 %v494, %v495
          %s497 = vtos %v496
          %v498 = vstv %s497
          %v499 = vld [vmem:[#allocation6] sm:$0xff]
          %v500 = vsel %vm422, %v499, 0.0
          %501 = vadd.xlane.f32.xlu0 %v500
          %v502 = vpop.xlane.xlu0 %501
          %v503 = vrot.slane %v502, 4
          %v504 = vadd.f32 %v502, %v503
          %v505 = vrot.slane %v504, 2
          %v506 = vadd.f32 %v504, %v505
          %v507 = vrot.slane %v506, 1
          %v508 = vadd.f32 %v506, %v507
          %s509 = vtos %v508
          %v510 = vstv %s509
          %v511 = vmul.f32 %v486, 20.0
          %v512 = vmul.f32 %v474, 2.0
          %v513 = vmul.f32 %v512, %v498
          %v514 = vadd.f32 %v511, %v513
          %v515 = vmul.f32 %v462, %v510
          %v516 = vadd.f32 %v514, %v515
          %v517 = vrcp.pop 400.0
          %v518 = vmul.f32 %v516, %v517
          %vm519 = vcmask 0
          %520 = vst.msk [vmem:[#allocation10] sm:$0x1] %vm519, %v518
        $region48: #{tpu_custom_call.1} parent=35 // pred_fallthru
          _
        // Predicated region
        $region49: #{tpu_custom_call.1} parent=35 // pred_check
          %p521 = pneg %p124
        $region50: #{tpu_custom_call.1} parent=35 // pred_check_branch
          %523 = sbr.rel (%p521) target = $region52
        $region51: #{tpu_custom_call.1} parent=35 // pred_region
          %s525 = ssub.s32 16, 16
          %526 = vsyncadd [#allocation9], %s525
          %s528 = sshll.u32 [#allocation10], 4
          %s529 = int_to_ptr.vmem [resolvable:$true] %s528
          %531 = dma.vmem_to_hbm [thread:$0]  %s529, 16, %s4, [#allocation9]
        $region52: #{tpu_custom_call.1} parent=35 // pred_fallthru
          _
        // Predicated region
        $region53: #{tpu_custom_call.1} parent=35 // pred_check
          %p532 = pneg %p124
        $region54: #{tpu_custom_call.1} parent=35 // pred_check_branch
          %534 = sbr.rel (%p532) target = $region56
        $region55: #{tpu_custom_call.1} parent=35 // pred_region
          %535 = dma.done [#allocation9], 16
        $region56: #{tpu_custom_call.1} parent=35 // pred_fallthru
          _
      $region36: #{tpu_custom_call.1} parent=5 // pred_fallthru
        _
      %p536 = scmp.le.s32.totalorder 2, %s12
      // Predicated region
      $region57: #{tpu_custom_call.1} parent=5 // pred_check
        %p537 = pneg %p536
      $region58: #{tpu_custom_call.1} parent=5 // pred_check_branch
        %539 = sbr.rel (%p537) target = $region60
      $region59: #{tpu_custom_call.1} parent=5 // pred_region
        %s540 = ssub.s32 %s12, 2
      $region60: #{tpu_custom_call.1} parent=5 // pred_fallthru
        _
    $region6: #{tpu_custom_call.1} parent=1 // loop_footer
      %s16 = sadd.s32 1, %s12
    $region7: #{tpu_custom_call.1} parent=1 // loop_footer_branch
      %11 = sbr.rel target = $region3
    $region8: #{tpu_custom_call.1} parent=1 // loop_exit
      _
    %541 = vsyncpa [#allocation8], 1
    %s542 = scalar_lea.sflag [#allocation8], 1
    %543 = vsyncpa %s542, 1
    %544 = vsyncpa [#allocation9], 1
    %s545 = scalar_lea.sflag [#allocation9], 1
    %546 = vsyncpa %s545, 1

</llo_original>
